<compile_context>
chip_gen: v6e
topology: v6e:2x2x1
jax: 0.10.0
libtpu: 0.0.40
codegen_flags: <defaults>
</compile_context>

<pallas_src>
import jax
import jax.numpy as jnp
import numpy as np
from jax import lax
from jax.experimental import pallas as pl
from jax.experimental.pallas import tpu as pltpu

BN_EPS = 1e-5
_VMEM_LIMIT = 32 * 1024 * 1024      # explicit scoped-VMEM limit (safe on v5e/v6e/v7x)
_VMEM_BUDGET = 20 * 1024 * 1024     # target per-step block footprint


def _round_up(x, m):
    return (x + m - 1) // m * m


def _pad2d(a, rows, cols):
    pr, pc = rows - a.shape[0], cols - a.shape[1]
    if pr or pc:
        a = jnp.pad(a, ((0, pr), (0, pc)))
    return a


# -------- pass 1: y = x @ W^T + b, accumulate per-channel sum / sum-of-squares
def _proj_stats_kernel(x_ref, w_ref, b_ref, y_ref, sum_ref, sq_ref):
    i = pl.program_id(1)            # row-tile index (stats reduction axis)

    @pl.when(i == 0)
    def _init():
        sum_ref[...] = jnp.zeros_like(sum_ref)
        sq_ref[...] = jnp.zeros_like(sq_ref)

    # MXU matmul: contract x's last dim with weight's last dim (nn.Linear layout).
    # Operands go to the MXU in their native dtype; accumulation is f32.
    y = lax.dot_general(
        x_ref[...], w_ref[...],
        dimension_numbers=(((1,), (1,)), ((), ())),
        preferred_element_type=jnp.float32) + b_ref[...]

    y_ref[...] = y.astype(y_ref.dtype)
    sum_ref[...] += jnp.sum(y, axis=0, keepdims=True)
    sq_ref[...] += jnp.sum(y * y, axis=0, keepdims=True)


# -------- pass 2: fused per-channel scale/shift (normalize in place)
def _normalize_kernel(y_ref, scale_ref, shift_ref, o_ref):
    o_ref[...] = (y_ref[...] * scale_ref[...] + shift_ref[...]).astype(o_ref.dtype)


def _pick_tiles(n_rows, c_in_p, c_out_p, in_itemsize):
    # Channel tile: lane-dense; 256 fills the v6e/v7x 2x256x256 MXU, 128 is the
    # fallback (and already MXU-filling on v5e's 4x128x128).
    tn = 256 if c_out_p % 256 == 0 else 128
    # Row tile: largest power-of-two keeping double-buffered x / y / W tiles
    # plus f32 body temporaries under the VMEM budget.
    tm = 1024
    while tm > 8:
        need = (2 * tm * c_in_p * in_itemsize    # x tile, double-buffered
                + 2 * tm * tn * 4                # y out tile, double-buffered (f32)
                + 2 * tn * c_in_p * in_itemsize  # W tile, double-buffered
                + 2 * tm * tn * 4)               # f32 temporaries in body
        if need <= _VMEM_BUDGET:
            break
        tm //= 2
    tm = min(max(tm, 8), _round_up(n_rows, 8))
    return tm, tn


@jax.jit
def embedding_encoder_mlp(x, weight, bias, gamma, beta):
    """x: (B, L, C_in); weight: (C_out, C_in) (PyTorch nn.Linear layout)."""
    B, L, C_in = x.shape
    C_out = weight.shape[0]
    N = B * L
    out_dtype = x.dtype

    # Lane-dense padding: channels to multiples of 128, rows to the row tile.
    c_in_p = _round_up(C_in, 128)
    c_out_p = _round_up(C_out, 128)
    tm, tn = _pick_tiles(N, c_in_p, c_out_p, jnp.dtype(x.dtype).itemsize)
    n_pad = _round_up(N, tm)

    x2d = _pad2d(x.reshape(N, C_in), n_pad, c_in_p)
    w_p = _pad2d(weight, c_out_p, c_in_p)
    b2d = _pad2d(bias.reshape(1, C_out).astype(jnp.float32), 1, c_out_p)
    g2d = _pad2d(gamma.reshape(1, C_out).astype(jnp.float32), 1, c_out_p)
    be2d = _pad2d(beta.reshape(1, C_out).astype(jnp.float32), 1, c_out_p)

    n_row_tiles = n_pad // tm
    n_chan_tiles = c_out_p // tn

    # ---- pass 1: projection + per-channel statistics ------------------------
    y, sums, sqs = pl.pallas_call(
        _proj_stats_kernel,
        out_shape=(
            jax.ShapeDtypeStruct((n_pad, c_out_p), jnp.float32),
            jax.ShapeDtypeStruct((1, c_out_p), jnp.float32),
            jax.ShapeDtypeStruct((1, c_out_p), jnp.float32),
        ),
        grid_spec=pltpu.PrefetchScalarGridSpec(
            num_scalar_prefetch=0,
            grid=(n_chan_tiles, n_row_tiles),        # rows last = stats reduction
            in_specs=[
                pl.BlockSpec((tm, c_in_p), lambda j, i: (i, 0)),   # x tile
                pl.BlockSpec((tn, c_in_p), lambda j, i: (j, 0)),   # W tile
                pl.BlockSpec((1, tn), lambda j, i: (0, j)),        # bias
            ],
            out_specs=[
                pl.BlockSpec((tm, tn), lambda j, i: (i, j)),       # y
                pl.BlockSpec((1, tn), lambda j, i: (0, j)),        # sum (resident)
                pl.BlockSpec((1, tn), lambda j, i: (0, j)),        # sumsq (resident)
            ],
        ),
        compiler_params=pltpu.CompilerParams(
            dimension_semantics=("parallel", "arbitrary"),
            vmem_limit_bytes=_VMEM_LIMIT),
    )(x2d, w_p, b2d)

    # ---- finalize per-channel stats (tiny (1, C) math, handled by XLA) ------
    n_row_pad = n_pad - N
    if n_row_pad:
        # Padded zero-rows project to exactly `bias`; remove their contribution.
        sums = sums - n_row_pad * b2d
        sqs = sqs - n_row_pad * (b2d * b2d)
    mean = sums / N
    var = jnp.maximum(sqs / N - mean * mean, 0.0)    # biased (training-mode) var
    scale = g2d * lax.rsqrt(var + BN_EPS)
    shift = be2d - mean * scale

    # ---- pass 2: fused normalize o = y*scale + shift, in place --------------
    alias = {0: 0} if jnp.dtype(out_dtype) == jnp.dtype(jnp.float32) else {}
    out2d = pl.pallas_call(
        _normalize_kernel,
        out_shape=jax.ShapeDtypeStruct((n_pad, c_out_p), out_dtype),
        grid_spec=pltpu.PrefetchScalarGridSpec(
            num_scalar_prefetch=0,
            grid=(n_row_tiles, n_chan_tiles),
            in_specs=[
                pl.BlockSpec((tm, tn), lambda i, j: (i, j)),
                pl.BlockSpec((1, tn), lambda i, j: (0, j)),
                pl.BlockSpec((1, tn), lambda i, j: (0, j)),
            ],
            out_specs=pl.BlockSpec((tm, tn), lambda i, j: (i, j)),
        ),
        compiler_params=pltpu.CompilerParams(
            dimension_semantics=("parallel", "parallel"),
            vmem_limit_bytes=_VMEM_LIMIT),
        input_output_aliases=alias,
    )(y, scale, shift)

    return out2d[:N, :C_out].reshape(B, L, C_out)


def _reference(x, weight, bias, gamma, beta):
    """Pure-JAX reference matching PyTorch training-mode forward."""
    y = jnp.einsum("blc,oc->blo", x, weight) + bias           # Linear
    mean = jnp.mean(y, axis=(0, 1), keepdims=True)            # BN batch stats
    var = jnp.mean((y - mean) ** 2, axis=(0, 1), keepdims=True)
    y_hat = (y - mean) / jnp.sqrt(var + BN_EPS)
    return y_hat * gamma + beta


if __name__ == "__main__":
    # Small shapes consistent with the module's B*L*C convention.
    B, L, C_in, C_out = 2, 8, 16, 32

    key = jax.random.PRNGKey(0)
    kx, kw, kb = jax.random.split(key, 3)

    x = jax.random.normal(kx, (B, L, C_in), dtype=jnp.float32)

    # Deterministic parameter init (shapes from nn.Linear / nn.BatchNorm1d).
    bound = 1.0 / np.sqrt(C_in)
    weight = jax.random.uniform(kw, (C_out, C_in), jnp.float32, -bound, bound)
    bias = jax.random.uniform(kb, (C_out,), jnp.float32, -bound, bound)
    gamma = jnp.ones((C_out,), jnp.float32)   # BatchNorm1d default init
    beta = jnp.zeros((C_out,), jnp.float32)

    out = jax.block_until_ready(
        embedding_encoder_mlp(x, weight, bias, gamma, beta))

    ref = _reference(x, weight, bias, gamma, beta)
    assert out.shape == (B, L, C_out), out.shape
    np.testing.assert_allclose(np.asarray(out), np.asarray(ref),
                               rtol=1e-4, atol=1e-5)
    print("KERNEL_OK")
</pallas_src>

<mosaic_0001>
module attributes {stable_mosaic.version = 11 : i64} {
  func.func @_normalize_kernel(%arg0: i32, %arg1: i32, %arg2: memref<16x128xf32, #tpu.memory_space<vmem>>, %arg3: memref<1x128xf32, #tpu.memory_space<vmem>>, %arg4: memref<1x128xf32, #tpu.memory_space<vmem>>, %arg5: memref<16x128xf32, #tpu.memory_space<vmem>>) attributes {dimension_semantics = [#tpu.dimension_semantics<parallel>, #tpu.dimension_semantics<parallel>], iteration_bounds = array<i64: 1, 1>, scalar_prefetch = 0 : i64, scratch_operands = 0 : i64, tpu.core_type = #tpu.core_type<tc>, window_params = [{transform_indices = @transform_0, window_bounds = array<i64: 16, 128>}, {transform_indices = @transform_1, window_bounds = array<i64: 1, 128>}, {transform_indices = @transform_2, window_bounds = array<i64: 1, 128>}, {transform_indices = @transform_3, window_bounds = array<i64: 16, 128>}]} {
    %c0 = arith.constant 0 : index
    %c0_0 = arith.constant 0 : index
    %0 = vector.load %arg2[%c0, %c0_0] : memref<16x128xf32, #tpu.memory_space<vmem>>, vector<16x128xf32>
    %c0_1 = arith.constant 0 : index
    %c0_2 = arith.constant 0 : index
    %1 = vector.load %arg3[%c0_1, %c0_2] : memref<1x128xf32, #tpu.memory_space<vmem>>, vector<1x128xf32>
    %2 = vector.broadcast %1 : vector<1x128xf32> to vector<16x128xf32>
    %3 = arith.mulf %0, %2 : vector<16x128xf32>
    %c0_3 = arith.constant 0 : index
    %c0_4 = arith.constant 0 : index
    %4 = vector.load %arg4[%c0_3, %c0_4] : memref<1x128xf32, #tpu.memory_space<vmem>>, vector<1x128xf32>
    %5 = vector.broadcast %4 : vector<1x128xf32> to vector<16x128xf32>
    %6 = arith.addf %3, %5 : vector<16x128xf32>
    %c0_5 = arith.constant 0 : index
    %c0_6 = arith.constant 0 : index
    %7 = vector.load %arg5[%c0_5, %c0_6] : memref<16x128xf32, #tpu.memory_space<vmem>>, vector<16x128xf32>
    tpu.vector_store %arg5[%c0_5, %c0_6], %6 {strides = array<i32>} : memref<16x128xf32, #tpu.memory_space<vmem>>, vector<16x128xf32>,
    return
  }
  func.func @transform_0(%arg0: i32, %arg1: i32) -> (i32, i32) {
    %c0_i32 = arith.constant 0 : i32
    return %arg0, %arg1 : i32, i32
  }
  func.func @transform_1(%arg0: i32, %arg1: i32) -> (i32, i32) {
    %c0_i32 = arith.constant 0 : i32
    %c0_i32_0 = arith.constant 0 : i32
    return %c0_i32, %arg1 : i32, i32
  }
  func.func @transform_2(%arg0: i32, %arg1: i32) -> (i32, i32) {
    %c0_i32 = arith.constant 0 : i32
    %c0_i32_0 = arith.constant 0 : i32
    return %c0_i32, %arg1 : i32, i32
  }
  func.func @transform_3(%arg0: i32, %arg1: i32) -> (i32, i32) {
    %c0_i32 = arith.constant 0 : i32
    return %arg0, %arg1 : i32, i32
  }
}

module attributes {stable_mosaic.version = 11 : i64} {
  func.func @_proj_stats_kernel(%arg0: i32, %arg1: i32, %arg2: memref<16x128xf32, #tpu.memory_space<vmem>>, %arg3: memref<128x128xf32, #tpu.memory_space<vmem>>, %arg4: memref<1x128xf32, #tpu.memory_space<vmem>>, %arg5: memref<16x128xf32, #tpu.memory_space<vmem>>, %arg6: memref<1x128xf32, #tpu.memory_space<vmem>>, %arg7: memref<1x128xf32, #tpu.memory_space<vmem>>) attributes {dimension_semantics = [#tpu.dimension_semantics<parallel>, #tpu.dimension_semantics<arbitrary>], iteration_bounds = array<i64: 1, 1>, scalar_prefetch = 0 : i64, scratch_operands = 0 : i64, tpu.core_type = #tpu.core_type<tc>, window_params = [{transform_indices = @transform_0, window_bounds = array<i64: 16, 128>}, {transform_indices = @transform_1, window_bounds = array<i64: 128, 128>}, {transform_indices = @transform_2, window_bounds = array<i64: 1, 128>}, {transform_indices = @transform_3, window_bounds = array<i64: 16, 128>}, {transform_indices = @transform_4, window_bounds = array<i64: 1, 128>}, {transform_indices = @transform_5, window_bounds = array<i64: 1, 128>}]} {
    %c0_i32 = arith.constant 0 : i32
    %0 = arith.cmpi eq, %arg1, %c0_i32 : i32
    %1 = arith.extui %0 : i1 to i32
    %c0_i32_0 = arith.constant 0 : i32
    %2 = arith.cmpi ne, %1, %c0_i32_0 : i32
    scf.if %2 {
      %cst_18 = arith.constant 0.000000e+00 : f32
      %21 = vector.broadcast %cst_18 : f32 to vector<1x128xf32>
      %c0_19 = arith.constant 0 : index
      %c0_20 = arith.constant 0 : index
      %22 = vector.load %arg6[%c0_19, %c0_20] : memref<1x128xf32, #tpu.memory_space<vmem>>, vector<1x128xf32>
      tpu.vector_store %arg6[%c0_19, %c0_20], %21 {strides = array<i32>} : memref<1x128xf32, #tpu.memory_space<vmem>>, vector<1x128xf32>,
      %cst_21 = arith.constant 0.000000e+00 : f32
      %23 = vector.broadcast %cst_21 : f32 to vector<1x128xf32>
      %c0_22 = arith.constant 0 : index
      %c0_23 = arith.constant 0 : index
      %24 = vector.load %arg7[%c0_22, %c0_23] : memref<1x128xf32, #tpu.memory_space<vmem>>, vector<1x128xf32>
      tpu.vector_store %arg7[%c0_22, %c0_23], %23 {strides = array<i32>} : memref<1x128xf32, #tpu.memory_space<vmem>>, vector<1x128xf32>,
    } else {
    }
    %c0 = arith.constant 0 : index
    %c0_1 = arith.constant 0 : index
    %3 = vector.load %arg2[%c0, %c0_1] : memref<16x128xf32, #tpu.memory_space<vmem>>, vector<16x128xf32>
    %c0_2 = arith.constant 0 : index
    %c0_3 = arith.constant 0 : index
    %4 = vector.load %arg3[%c0_2, %c0_3] : memref<128x128xf32, #tpu.memory_space<vmem>>, vector<128x128xf32>
    %cst = arith.constant dense<0.000000e+00> : vector<16x128xf32>
    %5 = tpu.matmul %3, %4, %cst {dimension_numbers = #tpu.dot_dimension_numbers<[1], [1], [0], [0], [0, 0, 1, 0], [], []>} : vector<16x128xf32>, vector<128x128xf32>, vector<16x128xf32> -> vector<16x128xf32>
    %c0_4 = arith.constant 0 : index
    %c0_5 = arith.constant 0 : index
    %6 = vector.load %arg4[%c0_4, %c0_5] : memref<1x128xf32, #tpu.memory_space<vmem>>, vector<1x128xf32>
    %7 = vector.broadcast %6 : vector<1x128xf32> to vector<16x128xf32>
    %8 = arith.addf %5, %7 : vector<16x128xf32>
    %c0_6 = arith.constant 0 : index
    %c0_7 = arith.constant 0 : index
    %9 = vector.load %arg5[%c0_6, %c0_7] : memref<16x128xf32, #tpu.memory_space<vmem>>, vector<16x128xf32>
    tpu.vector_store %arg5[%c0_6, %c0_7], %8 {strides = array<i32>} : memref<16x128xf32, #tpu.memory_space<vmem>>, vector<16x128xf32>,
    %c0_8 = arith.constant 0 : index
    %c0_9 = arith.constant 0 : index
    %10 = vector.load %arg6[%c0_8, %c0_9] : memref<1x128xf32, #tpu.memory_space<vmem>>, vector<1x128xf32>
    %cst_10 = arith.constant dense<0.000000e+00> : vector<128xf32>
    %11 = vector.multi_reduction <add>, %8, %cst_10 [0] : vector<16x128xf32> to vector<128xf32>
    %12 = vector.shape_cast %11 : vector<128xf32> to vector<1x128xf32>
    %13 = arith.addf %10, %12 : vector<1x128xf32>
    %c0_11 = arith.constant 0 : index
    %c0_12 = arith.constant 0 : index
    %14 = vector.load %arg6[%c0_11, %c0_12] : memref<1x128xf32, #tpu.memory_space<vmem>>, vector<1x128xf32>
    tpu.vector_store %arg6[%c0_11, %c0_12], %13 {strides = array<i32>} : memref<1x128xf32, #tpu.memory_space<vmem>>, vector<1x128xf32>,
    %c0_13 = arith.constant 0 : index
    %c0_14 = arith.constant 0 : index
    %15 = vector.load %arg7[%c0_13, %c0_14] : memref<1x128xf32, #tpu.memory_space<vmem>>, vector<1x128xf32>
    %16 = arith.mulf %8, %8 : vector<16x128xf32>
    %cst_15 = arith.constant dense<0.000000e+00> : vector<128xf32>
    %17 = vector.multi_reduction <add>, %16, %cst_15 [0] : vector<16x128xf32> to vector<128xf32>
    %18 = vector.shape_cast %17 : vector<128xf32> to vector<1x128xf32>
    %19 = arith.addf %15, %18 : vector<1x128xf32>
    %c0_16 = arith.constant 0 : index
    %c0_17 = arith.constant 0 : index
    %20 = vector.load %arg7[%c0_16, %c0_17] : memref<1x128xf32, #tpu.memory_space<vmem>>, vector<1x128xf32>
    tpu.vector_store %arg7[%c0_16, %c0_17], %19 {strides = array<i32>} : memref<1x128xf32, #tpu.memory_space<vmem>>, vector<1x128xf32>,
    return
  }
  func.func @transform_0(%arg0: i32, %arg1: i32) -> (i32, i32) {
    %c0_i32 = arith.constant 0 : i32
    %c0_i32_0 = arith.constant 0 : i32
    return %arg1, %c0_i32 : i32, i32
  }
  func.func @transform_1(%arg0: i32, %arg1: i32) -> (i32, i32) {
    %c0_i32 = arith.constant 0 : i32
    %c0_i32_0 = arith.constant 0 : i32
    return %arg0, %c0_i32 : i32, i32
  }
  func.func @transform_2(%arg0: i32, %arg1: i32) -> (i32, i32) {
    %c0_i32 = arith.constant 0 : i32
    %c0_i32_0 = arith.constant 0 : i32
    return %c0_i32, %arg0 : i32, i32
  }
  func.func @transform_3(%arg0: i32, %arg1: i32) -> (i32, i32) {
    %c0_i32 = arith.constant 0 : i32
    return %arg1, %arg0 : i32, i32
  }
  func.func @transform_4(%arg0: i32, %arg1: i32) -> (i32, i32) {
    %c0_i32 = arith.constant 0 : i32
    %c0_i32_0 = arith.constant 0 : i32
    return %c0_i32, %arg0 : i32, i32
  }
  func.func @transform_5(%arg0: i32, %arg1: i32) -> (i32, i32) {
    %c0_i32 = arith.constant 0 : i32
    %c0_i32_0 = arith.constant 0 : i32
    return %c0_i32, %arg0 : i32, i32
  }
}

</mosaic_0001>

<llo_original>
// kernel: embedding_encoder_mlp.3
$region0: #{embedding_encoder_mlp.3}
  #allocation0 [shape = 'u32[]', space=smem, size = 0x4, offset = 0x4, fixed_abs, tag = 'smem constant byte address 0x4 - core index']
  #allocation1 [shape = 'u32[144,128]{1,0:T(1,128)}', space=vmem, size = 0x12000, scoped, tag = 'internal scratch']
  %s0 = inlined_call_operand.vmem [shape: f32[16,128], index: 0, kind: input, shape index: {}, may-alias: {0,3}]
  %s1 = inlined_call_operand.vmem [shape: f32[1,128], index: 1, kind: input, shape index: {}]
  %s2 = inlined_call_operand.vmem [shape: f32[1,128], index: 2, kind: input, shape index: {}]
  %s3 = inlined_call_operand.vmem [shape: f32[16,128], index: 3, kind: output, shape index: {}, may-alias: {0,3}]
  %s4 = sld [smem:[#allocation0]]
  $region22: #{embedding_encoder_mlp.3} parent=0
    _
  %s6 = ssub.s32 1, %s4
  %s7 = scalar_select 0, %s6, %s4
  // Predicated region
  $region2: #{embedding_encoder_mlp.3} parent=0 // pred_check
    _
  $region3: #{embedding_encoder_mlp.3} parent=0 // pred_check_branch
    %9 = sbr.rel (0) target = $region5
  $region4: #{embedding_encoder_mlp.3} parent=0 // pred_region
    _
  $region5: #{embedding_encoder_mlp.3} parent=0 // pred_fallthru
    _
  // Predicated region
  $region6: #{embedding_encoder_mlp.3} parent=0 // pred_check
    _
  $region7: #{embedding_encoder_mlp.3} parent=0 // pred_check_branch
    %11 = sbr.rel (0) target = $region9
  $region8: #{embedding_encoder_mlp.3} parent=0 // pred_region
    _
  $region9: #{embedding_encoder_mlp.3} parent=0 // pred_fallthru
    _
  // Predicated region
  $region10: #{embedding_encoder_mlp.3} parent=0 // pred_check
    _
  $region11: #{embedding_encoder_mlp.3} parent=0 // pred_check_branch
    %13 = sbr.rel (0) target = $region13
  $region12: #{embedding_encoder_mlp.3} parent=0 // pred_region
    _
  $region13: #{embedding_encoder_mlp.3} parent=0 // pred_fallthru
    _
  %v14 = vld [vmem:[%s0] sm:$0xff]
  %v15 = vld [vmem:[%s0 + $0x8] sm:$0xff]
  %v16 = vld [vmem:[%s1] sm:$0x1]
  %v18 = vlaneseq
  %v19 = vshrl.u32 %v18, 7
  %v20 = vsub.s32 0, %v19
  %v21 = vrot.slane %v16, %v20
  %v23 = vmul.f32 %v14, %v21
  %v24 = vmul.f32 %v15, %v21
  %v25 = vld [vmem:[%s2] sm:$0x1]
  %v27 = vlaneseq
  %v28 = vshrl.u32 %v27, 7
  %v29 = vsub.s32 0, %v28
  %v30 = vrot.slane %v25, %v29
  %v32 = vadd.f32 %v23, %v30
  %v33 = vadd.f32 %v24, %v30
  %34 = vst [vmem:[%s3] sm:$0xff] %v32
  %35 = vst [vmem:[%s3 + $0x8] sm:$0xff] %v33
  // Predicated region
  $region14: #{embedding_encoder_mlp.3} parent=0 // pred_check
    _
  $region15: #{embedding_encoder_mlp.3} parent=0 // pred_check_branch
    %37 = sbr.rel (0) target = $region17
  $region16: #{embedding_encoder_mlp.3} parent=0 // pred_region
    _
  $region17: #{embedding_encoder_mlp.3} parent=0 // pred_fallthru
    _
  // Predicated region
  $region18: #{embedding_encoder_mlp.3} parent=0 // pred_check
    _
  $region19: #{embedding_encoder_mlp.3} parent=0 // pred_check_branch
    %39 = sbr.rel (0) target = $region21
  $region20: #{embedding_encoder_mlp.3} parent=0 // pred_region
    _
  $region21: #{embedding_encoder_mlp.3} parent=0 // pred_fallthru
    _

// kernel: embedding_encoder_mlp.2
$region0: #{embedding_encoder_mlp.2}
  #allocation0 [shape = 'u32[]', space=smem, size = 0x4, offset = 0x4, fixed_abs, tag = 'smem constant byte address 0x4 - core index']
  #allocation1 [shape = 'u32[144,128]{1,0:T(1,128)}', space=vmem, size = 0x12000, scoped, tag = 'internal scratch']
  %s0 = inlined_call_operand.vmem [shape: f32[16,128], index: 0, kind: input, shape index: {}]
  %s1 = inlined_call_operand.vmem [shape: f32[128,128], index: 1, kind: input, shape index: {}]
  %s2 = inlined_call_operand.vmem [shape: f32[1,128], index: 2, kind: input, shape index: {}]
  %s3 = inlined_call_operand.vmem [shape: f32[16,128], index: 3, kind: output, shape index: {0}]
  %s4 = inlined_call_operand.vmem [shape: f32[1,128], index: 4, kind: output, shape index: {1}]
  %s5 = inlined_call_operand.vmem [shape: f32[1,128], index: 5, kind: output, shape index: {2}]
  %6 = xla_tuple %s3, %s4, %s5
  %s7 = sld [smem:[#allocation0]]
  $region42: #{embedding_encoder_mlp.2} parent=0
    _
  %s9 = ssub.s32 1, %s7
  %s10 = scalar_select 0, %s9, %s7
  // Predicated region
  $region2: #{embedding_encoder_mlp.2} parent=0 // pred_check
    _
  $region3: #{embedding_encoder_mlp.2} parent=0 // pred_check_branch
    %12 = sbr.rel (0) target = $region5
  $region4: #{embedding_encoder_mlp.2} parent=0 // pred_region
    _
  $region5: #{embedding_encoder_mlp.2} parent=0 // pred_fallthru
    _
  // Predicated region
  $region6: #{embedding_encoder_mlp.2} parent=0 // pred_check
    _
  $region7: #{embedding_encoder_mlp.2} parent=0 // pred_check_branch
    %14 = sbr.rel (0) target = $region9
  $region8: #{embedding_encoder_mlp.2} parent=0 // pred_region
    _
  $region9: #{embedding_encoder_mlp.2} parent=0 // pred_fallthru
    _
  // Predicated region
  $region10: #{embedding_encoder_mlp.2} parent=0 // pred_check
    _
  $region11: #{embedding_encoder_mlp.2} parent=0 // pred_check_branch
    %16 = sbr.rel (0) target = $region13
  $region12: #{embedding_encoder_mlp.2} parent=0 // pred_region
    _
  $region13: #{embedding_encoder_mlp.2} parent=0 // pred_fallthru
    _
  %p17 = scmp.eq.s32.totalorder 0, 0
  // Predicated region
  $region14: #{embedding_encoder_mlp.2} parent=0 // pred_check
    %p18 = pneg %p17
  $region15: #{embedding_encoder_mlp.2} parent=0 // pred_check_branch
    %20 = sbr.rel (%p18) target = $region17
  $region16: #{embedding_encoder_mlp.2} parent=0 // pred_region
    %21 = vst [vmem:[%s4] sm:$0x1] 0.0
    %22 = vst [vmem:[%s5] sm:$0x1] 0.0
  $region17: #{embedding_encoder_mlp.2} parent=0 // pred_fallthru
    _
  %v23 = vld [vmem:[%s0] sm:$0xff]
  %v24 = vld [vmem:[%s0 + $0x8] sm:$0xff]
  %v25 = vld [vmem:[%s1] sm:$0xff]
  %v26 = vld [vmem:[%s1 + $0x8] sm:$0xff]
  %v27 = vld [vmem:[%s1 + $0x10] sm:$0xff]
  %v28 = vld [vmem:[%s1 + $0x18] sm:$0xff]
  %v29 = vld [vmem:[%s1 + $0x20] sm:$0xff]
  %v30 = vld [vmem:[%s1 + $0x28] sm:$0xff]
  %v31 = vld [vmem:[%s1 + $0x30] sm:$0xff]
  %v32 = vld [vmem:[%s1 + $0x38] sm:$0xff]
  %v33 = vld [vmem:[%s1 + $0x40] sm:$0xff]
  %v34 = vld [vmem:[%s1 + $0x48] sm:$0xff]
  %v35 = vld [vmem:[%s1 + $0x50] sm:$0xff]
  %v36 = vld [vmem:[%s1 + $0x58] sm:$0xff]
  %v37 = vld [vmem:[%s1 + $0x60] sm:$0xff]
  %v38 = vld [vmem:[%s1 + $0x68] sm:$0xff]
  %v39 = vld [vmem:[%s1 + $0x70] sm:$0xff]
  %v40 = vld [vmem:[%s1 + $0x78] sm:$0xff]
  %v41 = vld [vmem:[%s2] sm:$0x1]
  %v43 = vlaneseq
  %v44 = vshrl.u32 %v43, 7
  %v45 = vsub.s32 0, %v44
  %v46 = vrot.slane %v41, %v45
  %48 = vmatprep.subr.mxu0 0.0
  %49 = vmatpush1.xpose.msra.mxu0 %v40
  %50 = vmatprep.subr.mxu0 0.0
  %51 = vmatpush1.xpose.msra.mxu0 %v39
  %52 = vmatprep.subr.mxu0 0.0
  %53 = vmatpush1.xpose.msra.mxu0 %v38
  %54 = vmatprep.subr.mxu0 0.0
  %55 = vmatpush1.xpose.msra.mxu0 %v37
  %56 = vmatprep.subr.mxu0 0.0
  %57 = vmatpush1.xpose.msra.mxu0 %v36
  %58 = vmatprep.subr.mxu0 0.0
  %59 = vmatpush1.xpose.msra.mxu0 %v35
  %60 = vmatprep.subr.mxu0 0.0
  %61 = vmatpush1.xpose.msra.mxu0 %v34
  %62 = vmatprep.subr.mxu0 0.0
  %63 = vmatpush1.xpose.msra.mxu0 %v33
  %64 = vmatprep.subr.mxu0 0.0
  %65 = vmatpush1.xpose.msra.mxu0 %v32
  %66 = vmatprep.subr.mxu0 0.0
  %67 = vmatpush1.xpose.msra.mxu0 %v31
  %68 = vmatprep.subr.mxu0 0.0
  %69 = vmatpush1.xpose.msra.mxu0 %v30
  %70 = vmatprep.subr.mxu0 0.0
  %71 = vmatpush1.xpose.msra.mxu0 %v29
  %72 = vmatprep.subr.mxu0 0.0
  %73 = vmatpush1.xpose.msra.mxu0 %v28
  %74 = vmatprep.subr.mxu0 0.0
  %75 = vmatpush1.xpose.msra.mxu0 %v27
  %76 = vmatprep.subr.mxu0 0.0
  %77 = vmatpush1.xpose.msra.mxu0 %v26
  %78 = vmatprep.subr.mxu0 0.0
  %79 = vmatpush1.xpose.msra.mxu0 %v25
  %80 = vmatprep.subr.mxu0 0.0
  %81 = vmatpush2.xpose.msra.mxu0 0.0
  %82 = vmatprep.subr.mxu0 0.0
  %83 = vmatpush2.xpose.msra.mxu0 0.0
  %84 = vmatprep.subr.mxu0 0.0
  %85 = vmatpush2.xpose.msra.mxu0 0.0
  %86 = vmatprep.subr.mxu0 0.0
  %87 = vmatpush2.xpose.msra.mxu0 0.0
  %88 = vmatprep.subr.mxu0 0.0
  %89 = vmatpush2.xpose.msra.mxu0 0.0
  %90 = vmatprep.subr.mxu0 0.0
  %91 = vmatpush2.xpose.msra.mxu0 0.0
  %92 = vmatprep.subr.mxu0 0.0
  %93 = vmatpush2.xpose.msra.mxu0 0.0
  %94 = vmatprep.subr.mxu0 0.0
  %95 = vmatpush2.xpose.msra.mxu0 0.0
  %96 = vmatprep.subr.mxu0 0.0
  %97 = vmatpush2.xpose.msra.mxu0 0.0
  %98 = vmatprep.subr.mxu0 0.0
  %99 = vmatpush2.xpose.msra.mxu0 0.0
  %100 = vmatprep.subr.mxu0 0.0
  %101 = vmatpush2.xpose.msra.mxu0 0.0
  %102 = vmatprep.subr.mxu0 0.0
  %103 = vmatpush2.xpose.msra.mxu0 0.0
  %104 = vmatprep.subr.mxu0 0.0
  %105 = vmatpush2.xpose.msra.mxu0 0.0
  %106 = vmatprep.subr.mxu0 0.0
  %107 = vmatpush2.xpose.msra.mxu0 0.0
  %108 = vmatprep.subr.mxu0 0.0
  %109 = vmatpush2.xpose.msra.mxu0 0.0
  %110 = vmatprep.subr.mxu0 0.0
  %111 = vmatpush2.xpose.msra.mxu0 0.0
  %112 = vmatprep.mubr.f32.mxu0 0.0
  %113 = vmatmul.mubr.f32.gmra.mxu0 %v23
  %v114 = vpop.f32.mrf.mxu0
  %v115 = vadd.f32 %v46, %v114
  %v116 = vpop.f32.mrf.mxu0
  %117 = vmatprep.mubr.f32.mxu0 0.0
  %118 = vmatmul.mubr.f32.gmra.mxu0 %v24
  %v119 = vpop.f32.mrf.mxu0
  %v120 = vadd.f32 %v46, %v119
  %v121 = vpop.f32.mrf.mxu0
  %122 = vdwg.mxu0
  %123 = vst [vmem:[%s3] sm:$0xff] %v115
  %124 = vst [vmem:[%s3 + $0x8] sm:$0xff] %v120
  %v125 = vld [vmem:[%s4] sm:$0x1]
  %v126 = vadd.f32 %v115, %v120
  %v127 = vrot.slane %v126, 4
  %v128 = vadd.f32 %v126, %v127
  %v129 = vrot.slane %v128, 2
  %v130 = vadd.f32 %v128, %v129
  %v131 = vrot.slane %v130, 1
  %v132 = vadd.f32 %v130, %v131
  %v133 = vadd.f32 %v125, %v132
  %134 = vst [vmem:[%s4] sm:$0x1] %v133
  %v135 = vld [vmem:[%s5] sm:$0x1]
  %v136 = vmul.f32 %v115, %v115
  %v137 = vmul.f32 %v120, %v120
  %v138 = vadd.f32 %v136, %v137
  %v139 = vrot.slane %v138, 4
  %v140 = vadd.f32 %v138, %v139
  %v141 = vrot.slane %v140, 2
  %v142 = vadd.f32 %v140, %v141
  %v143 = vrot.slane %v142, 1
  %v144 = vadd.f32 %v142, %v143
  %v145 = vadd.f32 %v135, %v144
  %146 = vst [vmem:[%s5] sm:$0x1] %v145
  // Predicated region
  $region18: #{embedding_encoder_mlp.2} parent=0 // pred_check
    _
  $region19: #{embedding_encoder_mlp.2} parent=0 // pred_check_branch
    %148 = sbr.rel (0) target = $region21
  $region20: #{embedding_encoder_mlp.2} parent=0 // pred_region
    _
  $region21: #{embedding_encoder_mlp.2} parent=0 // pred_fallthru
    _
  // Predicated region
  $region22: #{embedding_encoder_mlp.2} parent=0 // pred_check
    _
  $region23: #{embedding_encoder_mlp.2} parent=0 // pred_check_branch
    %150 = sbr.rel (0) target = $region25
  $region24: #{embedding_encoder_mlp.2} parent=0 // pred_region
    _
  $region25: #{embedding_encoder_mlp.2} parent=0 // pred_fallthru
    _
  // Predicated region
  $region26: #{embedding_encoder_mlp.2} parent=0 // pred_check
    _
  $region27: #{embedding_encoder_mlp.2} parent=0 // pred_check_branch
    %152 = sbr.rel (0) target = $region29
  $region28: #{embedding_encoder_mlp.2} parent=0 // pred_region
    _
  $region29: #{embedding_encoder_mlp.2} parent=0 // pred_fallthru
    _
  // Predicated region
  $region30: #{embedding_encoder_mlp.2} parent=0 // pred_check
    _
  $region31: #{embedding_encoder_mlp.2} parent=0 // pred_check_branch
    %154 = sbr.rel (0) target = $region33
  $region32: #{embedding_encoder_mlp.2} parent=0 // pred_region
    _
  $region33: #{embedding_encoder_mlp.2} parent=0 // pred_fallthru
    _
  // Predicated region
  $region34: #{embedding_encoder_mlp.2} parent=0 // pred_check
    _
  $region35: #{embedding_encoder_mlp.2} parent=0 // pred_check_branch
    %156 = sbr.rel (0) target = $region37
  $region36: #{embedding_encoder_mlp.2} parent=0 // pred_region
    _
  $region37: #{embedding_encoder_mlp.2} parent=0 // pred_fallthru
    _
  // Predicated region
  $region38: #{embedding_encoder_mlp.2} parent=0 // pred_check
    _
  $region39: #{embedding_encoder_mlp.2} parent=0 // pred_check_branch
    %158 = sbr.rel (0) target = $region41
  $region40: #{embedding_encoder_mlp.2} parent=0 // pred_region
    _
  $region41: #{embedding_encoder_mlp.2} parent=0 // pred_fallthru
    _

</llo_original>
